<compile_context>
chip_gen: v7x
topology: tpu7x:2x2x1
jax: 0.10.0
libtpu: 0.0.40
codegen_flags: <defaults>
</compile_context>

<pallas_src>
import jax
import jax.numpy as jnp
from jax.experimental import pallas as pl
from jax.experimental.pallas import tpu as pltpu


def _identity_copy_kernel(x_ref, o_ref):
    # Elementwise copy of the current VMEM tile.
    o_ref[...] = x_ref[...]


_LANES = 1024                      # lane-dense last dim (multiple of 128)
_TILE_BYTES = 2 * 1024 * 1024      # ~2 MiB per tile (x2 arrays x2 buffers = 8 MiB VMEM)


def _cdiv(a, b):
    return -(-a // b)


def _pallas_copy(x: jax.Array) -> jax.Array:
    """Physical copy of `x` via a tiled, lane-dense Pallas kernel."""
    dtype = x.dtype
    itemsize = jnp.dtype(dtype).itemsize
    # Sublane tile: 8 for 4-byte, 16 for 2-byte, 32 for 1-byte dtypes.
    sublane = 8 * max(1, 4 // max(1, itemsize))

    n = x.size
    flat = x.reshape(-1)

    cols = _LANES
    rows = _cdiv(n, cols)

    # Row tile: ~_TILE_BYTES per tile, rounded to a sublane multiple.
    tr_cap = max(sublane, (_TILE_BYTES // (cols * itemsize)) // sublane * sublane)
    if rows <= tr_cap:
        tr = _cdiv(rows, sublane) * sublane    # small input: one aligned tile
    else:
        tr = tr_cap                            # large input: fixed 2 MiB tile
    rows_pad = _cdiv(rows, tr) * tr

    pad = rows_pad * cols - n
    if pad:
        flat = jnp.pad(flat, (0, pad))
    x2 = flat.reshape(rows_pad, cols)

    grid = (rows_pad // tr,)

    out2 = pl.pallas_call(
        _identity_copy_kernel,
        out_shape=jax.ShapeDtypeStruct((rows_pad, cols), dtype),
        grid_spec=pltpu.PrefetchScalarGridSpec(
            num_scalar_prefetch=0,
            grid=grid,
            in_specs=[pl.BlockSpec((tr, cols), lambda i: (i, 0))],
            out_specs=pl.BlockSpec((tr, cols), lambda i: (i, 0)),
        ),
        compiler_params=pltpu.CompilerParams(
            dimension_semantics=("parallel",),
            vmem_limit_bytes=32 * 1024 * 1024,
        ),
    )(x2)

    out_flat = out2.reshape(-1)
    if pad:
        out_flat = out_flat[:n]
    return out_flat.reshape(x.shape)


def identity_pallas(x: jax.Array, *, force_copy: bool = False) -> jax.Array:
    """Identity forward pass.

    Default: return `x` unchanged — identity is semantically free, so no HBM
    traffic and no kernel launch (the top recommendation of the perf review).

    force_copy=True: produce a fresh buffer using the optimized Pallas copy
    kernel (only for callers that genuinely require a distinct output buffer).
    """
    if not force_copy:
        return x
    if x.size == 0:
        return x
    return _pallas_copy(x)


if __name__ == "__main__":
    key = jax.random.PRNGKey(0)
    # Small NCHW input consistent with how Identity is used inside the
    # siamese classifier (replacing a conv/feature layer output).
    x = jax.random.normal(key, (2, 4, 16, 16), dtype=jnp.float32)

    # Fast path: no kernel, no copy — identity is free.
    y = identity_pallas(x)
    jax.block_until_ready(y)
    assert y.shape == x.shape and y.dtype == x.dtype
    assert bool(jnp.all(y == x))

    # Explicit-copy path: exercises the lane-dense tiled Pallas kernel.
    y_copy = identity_pallas(x, force_copy=True)
    jax.block_until_ready(y_copy)
    assert y_copy.shape == x.shape and y_copy.dtype == x.dtype
    assert bool(jnp.all(y_copy == x))

    print("KERNEL_OK")
</pallas_src>

<mosaic_0001>
module attributes {stable_mosaic.version = 11 : i64} {
  func.func @_identity_copy_kernel(%arg0: i32, %arg1: memref<8x1024xf32, #tpu.memory_space<vmem>>, %arg2: memref<8x1024xf32, #tpu.memory_space<vmem>>) attributes {dimension_semantics = [#tpu.dimension_semantics<parallel>], iteration_bounds = array<i64: 1>, scalar_prefetch = 0 : i64, scratch_operands = 0 : i64, tpu.core_type = #tpu.core_type<tc>, window_params = [{transform_indices = @transform_0, window_bounds = array<i64: 8, 1024>}, {transform_indices = @transform_1, window_bounds = array<i64: 8, 1024>}]} {
    %c0 = arith.constant 0 : index
    %c0_0 = arith.constant 0 : index
    %0 = vector.load %arg1[%c0, %c0_0] : memref<8x1024xf32, #tpu.memory_space<vmem>>, vector<8x1024xf32>
    %c0_1 = arith.constant 0 : index
    %c0_2 = arith.constant 0 : index
    %1 = vector.load %arg2[%c0_1, %c0_2] : memref<8x1024xf32, #tpu.memory_space<vmem>>, vector<8x1024xf32>
    tpu.vector_store %arg2[%c0_1, %c0_2], %0 {strides = array<i32>} : memref<8x1024xf32, #tpu.memory_space<vmem>>, vector<8x1024xf32>,
    return
  }
  func.func @transform_0(%arg0: i32) -> (i32, i32) {
    %c0_i32 = arith.constant 0 : i32
    %c0_i32_0 = arith.constant 0 : i32
    return %arg0, %c0_i32 : i32, i32
  }
  func.func @transform_1(%arg0: i32) -> (i32, i32) {
    %c0_i32 = arith.constant 0 : i32
    %c0_i32_0 = arith.constant 0 : i32
    return %arg0, %c0_i32 : i32, i32
  }
}

</mosaic_0001>

<llo_original>
// kernel: tpu_custom_call.1
$region0: #{tpu_custom_call.1}
  #allocation0 [shape = 'u32[]', space=smem, size = 0x4, offset = 0x4, fixed_abs, tag = 'smem constant byte address 0x4 - core index']
  #allocation1 [shape = 'u32[144,128]{1,0:T(1,128)}', space=vmem, size = 0x12000, scoped, tag = 'internal scratch']
  %s0 = inlined_call_operand.hbm [shape: f32[8,1024], index: 0, kind: input, shape index: {}]
  %s1 = inlined_call_operand.hbm [shape: f32[8,1024], index: 1, kind: output, shape index: {}]
  %s2 = sld [smem:[#allocation0]]
  $region18: #{tpu_custom_call.1} parent=0
    _
  %s4 = ssub.s32 1, %s2
  %s5 = scalar_select 0, %s4, %s2
  $region1: #{tpu_custom_call.1} parent=0
    #allocation2 [shape = 'u8[32768]{0}', space=vmem, size = 0x8000, scoped, tag = 'input window, operand 0, single buffered']
    #allocation3 [shape = 's32[1]{0}', space=sflag, size = 0x4, scoped, tag = 'scoped memory for tpu_custom_call.1']
    #allocation4 [shape = 's32[1]{0}', space=sflag, size = 0x4, scoped, tag = 'scoped memory for tpu_custom_call.1']
    #allocation5 [shape = 'u8[32768]{0}', space=vmem, size = 0x8000, scoped, tag = 'output window, operand 0, single buffered']
    %6 = vsyncpa [#allocation3], 0
    %7 = vsyncpa [#allocation4], 0
    // Predicated region
    $region2: #{tpu_custom_call.1} parent=1 // pred_check
      _
    $region3: #{tpu_custom_call.1} parent=1 // pred_check_branch
      %9 = sbr.rel (0) target = $region5
    $region4: #{tpu_custom_call.1} parent=1 // pred_region
      %s11 = ssub.s32 1024, 1024
      %12 = vsyncadd [#allocation3], %s11
      %s14 = sshll.u32 [#allocation2], 4
      %s15 = int_to_ptr.vmem [resolvable:$true] %s14
      %17 = dma.hbm_to_vmem [thread:$0]  %s0, 1024, %s15, [#allocation3]
    $region5: #{tpu_custom_call.1} parent=1 // pred_fallthru
      _
    // Predicated region
    $region6: #{tpu_custom_call.1} parent=1 // pred_check
      _
    $region7: #{tpu_custom_call.1} parent=1 // pred_check_branch
      %19 = sbr.rel (0) target = $region9
    $region8: #{tpu_custom_call.1} parent=1 // pred_region
      %20 = dma.done [#allocation3], 1024
    $region9: #{tpu_custom_call.1} parent=1 // pred_fallthru
      _
    %v21 = vld [vmem:[#allocation2] sm:$0xff]
    %v22 = vld [vmem:[#allocation2 + $0x8] sm:$0xff]
    %v23 = vld [vmem:[#allocation2 + $0x10] sm:$0xff]
    %v24 = vld [vmem:[#allocation2 + $0x18] sm:$0xff]
    %v25 = vld [vmem:[#allocation2 + $0x20] sm:$0xff]
    %v26 = vld [vmem:[#allocation2 + $0x28] sm:$0xff]
    %v27 = vld [vmem:[#allocation2 + $0x30] sm:$0xff]
    %v28 = vld [vmem:[#allocation2 + $0x38] sm:$0xff]
    %29 = vst [vmem:[#allocation5] sm:$0xff] %v21
    %30 = vst [vmem:[#allocation5 + $0x8] sm:$0xff] %v22
    %31 = vst [vmem:[#allocation5 + $0x10] sm:$0xff] %v23
    %32 = vst [vmem:[#allocation5 + $0x18] sm:$0xff] %v24
    %33 = vst [vmem:[#allocation5 + $0x20] sm:$0xff] %v25
    %34 = vst [vmem:[#allocation5 + $0x28] sm:$0xff] %v26
    %35 = vst [vmem:[#allocation5 + $0x30] sm:$0xff] %v27
    %36 = vst [vmem:[#allocation5 + $0x38] sm:$0xff] %v28
    // Predicated region
    $region10: #{tpu_custom_call.1} parent=1 // pred_check
      _
    $region11: #{tpu_custom_call.1} parent=1 // pred_check_branch
      %38 = sbr.rel (0) target = $region13
    $region12: #{tpu_custom_call.1} parent=1 // pred_region
      %s40 = ssub.s32 1024, 1024
      %41 = vsyncadd [#allocation4], %s40
      %s43 = sshll.u32 [#allocation5], 4
      %s44 = int_to_ptr.vmem [resolvable:$true] %s43
      %46 = dma.vmem_to_hbm [thread:$0]  %s44, 1024, %s1, [#allocation4]
    $region13: #{tpu_custom_call.1} parent=1 // pred_fallthru
      _
    // Predicated region
    $region14: #{tpu_custom_call.1} parent=1 // pred_check
      _
    $region15: #{tpu_custom_call.1} parent=1 // pred_check_branch
      %48 = sbr.rel (0) target = $region17
    $region16: #{tpu_custom_call.1} parent=1 // pred_region
      %49 = dma.done [#allocation4], 1024
    $region17: #{tpu_custom_call.1} parent=1 // pred_fallthru
      _
    %50 = vsyncpa [#allocation3], 1
    %51 = vsyncpa [#allocation4], 1

</llo_original>
